<compile_context>
chip_gen: v7x
topology: tpu7x:2x2x1
jax: 0.10.0
libtpu: 0.0.40
codegen_flags: <defaults>
</compile_context>

<pallas_src>
import jax
import jax.numpy as jnp
from jax.experimental import pallas as pl
from jax.experimental.pallas import tpu as pltpu


# ----------------------------- Pallas kernel -------------------------------
def make_cnn_kernel(n_extra_convs, B, T1):
    """Fused CNN forward kernel; B/T1 and the number of k=2 convs are static."""
    R = B * T1  # total rows carried through the whole kernel (8-aligned)

    def kernel(*refs):
        patches_ref = refs[0]                          # (R, Cin*K1)
        w1_ref, b1_ref = refs[1], refs[2]              # (Cin*K1, H), (1, H)
        conv_refs = refs[3:3 + 3 * n_extra_convs]      # [tap0(H,H), tap1(H,H), b(1,H)]*n
        wfc_ref = refs[3 + 3 * n_extra_convs]          # (Tp, H, NCP)  NCP=128 padded
        bfc_ref = refs[4 + 3 * n_extra_convs]          # (1, NCP)
        out_ref = refs[5 + 3 * n_extra_convs]          # (B, NCP)

        H = w1_ref.shape[1]
        Tp = wfc_ref.shape[0]
        f32 = jnp.float32

        # ---- conv1 (kernel=5, stride=3): one matmul over im2col rows ------
        h = jnp.dot(patches_ref[...], w1_ref[...], preferred_element_type=f32)
        h = jnp.maximum(h + b1_ref[...], 0.0)                      # (R, H)

        # Constant superdiagonal shift matrix: (S @ h)[r] = h[r+1] (last row
        # -> 0).  Built once; every use is one tiny MXU push, zero XLU work.
        # (Fine for small R; for large R use pltpu.roll on the sublane axis.)
        row = jax.lax.broadcasted_iota(jnp.int32, (R, R), 0)
        col = jax.lax.broadcasted_iota(jnp.int32, (R, R), 1)
        shift1 = jnp.where(col == row + 1, 1.0, 0.0).astype(f32)   # (R, R)

        # ---- k=2 convs: two accumulated dots on the full R rows -----------
        # Rows past the per-batch valid length become junk (finite) and are
        # never consumed by the pooling below.
        for i in range(n_extra_convs):
            tap0 = conv_refs[3 * i][...]                           # (H, H)
            tap1 = conv_refs[3 * i + 1][...]                       # (H, H)
            bb = conv_refs[3 * i + 2][...]                         # (1, H)
            h_next = jnp.dot(shift1, h, preferred_element_type=f32)   # h[t+1]
            h = (jnp.dot(h, tap0, preferred_element_type=f32)
                 + jnp.dot(h_next, tap1, preferred_element_type=f32))
            h = jnp.maximum(h + bb, 0.0)                           # (R, H)

        # ---- max_pool1d(k=3, s=3) fused with the Linear --------------------
        # pooled[r] = max(h[r], h[r+1], h[r+2]); only the window-start rows
        # r = b*T1 + 3j (all inside batch b's valid range) are consumed.
        h1 = jnp.dot(shift1, h, preferred_element_type=f32)
        h2 = jnp.dot(shift1, h1, preferred_element_type=f32)
        pooled = jnp.maximum(jnp.maximum(h, h1), h2).reshape(B, T1, H)

        # Tp unrolled (B,H)@(H,NCP) dots accumulated in f32 — no sublane->lane
        # flatten of the pooled activations, lane-dense output.
        acc = jnp.dot(pooled[:, 0:1, :].reshape(B, H), wfc_ref[0],
                      preferred_element_type=f32)                  # (B, NCP)
        for j in range(1, Tp):
            wj = pooled[:, 3 * j:3 * j + 1, :].reshape(B, H)
            acc = acc + jnp.dot(wj, wfc_ref[j], preferred_element_type=f32)
        out_ref[...] = acc + bfc_ref[...]

    return kernel


# ------------------------------- JAX glue -----------------------------------
def im2col_1d(x, K, stride):
    """x: (B, C, L) -> (B*T, C*K) with rows = (b, t), cols = c*K + k."""
    B, C, L = x.shape
    T = (L - K) // stride + 1
    cols = [x[:, :, k:k + stride * (T - 1) + 1:stride] for k in range(K)]  # K x (B,C,T)
    p = jnp.stack(cols, axis=-1)                                # (B, C, T, K)
    return jnp.transpose(p, (0, 2, 1, 3)).reshape(B * T, C * K)


def prepare_params(params, num_classes, nc_pad=128):
    """One-time weight preprocessing, hoisted out of the per-call path."""
    w1, b1, convs, wfc, bfc = params
    H, Cin, K1 = w1.shape
    w1m = jnp.transpose(w1, (1, 2, 0)).reshape(Cin * K1, H)      # row = c*K1 + k
    b1k = b1.reshape(1, H)
    conv_args = []
    for (w2, b2) in convs:
        conv_args += [jnp.transpose(w2[:, :, 0]),                # tap0: (Hin, Hout)
                      jnp.transpose(w2[:, :, 1]),                # tap1: (Hin, Hout)
                      b2.reshape(1, H)]
    # PyTorch flatten order after pooling is (channel, time): col = h*Tp + j.
    Tp = wfc.shape[1] // H
    wfc3 = jnp.transpose(wfc.reshape(num_classes, H, Tp), (2, 1, 0))  # (Tp, H, nc)
    wfc3 = jnp.pad(wfc3, ((0, 0), (0, 0), (0, nc_pad - num_classes)))  # lane-dense
    bfcp = jnp.pad(bfc.reshape(1, num_classes), ((0, 0), (0, nc_pad - num_classes)))
    return (w1m, b1k, tuple(conv_args), wfc3, bfcp)


def cnn_forward(x, prepped, *, num_classes):
    """Pallas-backed forward.  x: (B, Cin, L) float32 (PyTorch NCL layout)."""
    w1m, b1k, conv_args, wfc3, bfcp = prepped
    B, _, L = x.shape
    K1, S1 = 5, 3
    T1 = (L - K1) // S1 + 1
    n_extra = len(conv_args) // 3
    NCP = wfc3.shape[-1]

    patches = im2col_1d(x, K1, S1)                               # (B*T1, Cin*K1)
    args = [patches, w1m, b1k, *conv_args, wfc3, bfcp]
    vmem = pl.BlockSpec(memory_space=pltpu.MemorySpace.VMEM)
    out_pad = pl.pallas_call(
        make_cnn_kernel(n_extra, B, T1),
        out_shape=jax.ShapeDtypeStruct((B, NCP), jnp.float32),
        in_specs=[vmem] * len(args),
        out_specs=vmem,
    )(*args)
    return out_pad[:, :num_classes]


# --------------------------- pure-JAX reference ------------------------------
def ref_forward(x, params):
    w1, b1, convs, wfc, bfc = params
    B, C, L = x.shape
    T1 = (L - 5) // 3 + 1
    h = jnp.stack([jnp.einsum("oik,bik->bo", w1, x[:, :, 3 * t:3 * t + 5])
                   for t in range(T1)], axis=-1) + b1[None, :, None]
    h = jnp.maximum(h, 0.0)
    T = T1
    for (w2, b2) in convs:
        T -= 1
        h = jnp.stack([jnp.einsum("oik,bik->bo", w2, h[:, :, t:t + 2])
                       for t in range(T)], axis=-1) + b2[None, :, None]
        h = jnp.maximum(h, 0.0)
    Tp = T // 3
    p = jnp.stack([jnp.max(h[:, :, 3 * j:3 * j + 3], axis=-1)
                   for j in range(Tp)], axis=-1)                 # (B, H, Tp)
    flat = p.reshape(B, -1)
    return flat @ wfc.T + bfc[None, :]


# --------------------------------- main --------------------------------------
if __name__ == "__main__":
    # Module config: CNN(num_features=4, hidden_layer=32, layer_num=2, num_classes=3)
    B, Cin, L = 2, 4, 50          # L=50 -> conv1:16 -> conv2:15 -> pool:5 = multiples[1]
    H, layer_num, num_classes = 32, 2, 3
    multiples = [5, 5, 4, 4, 4, 3, 3, 3, 2, 2, 2, 1, 1, 1]

    key = jax.random.PRNGKey(0)
    ks = jax.random.split(key, 5 + 2 * (layer_num - 1))

    def uinit(k, shape, fan_in):
        bound = 1.0 / jnp.sqrt(jnp.float32(fan_in))
        return jax.random.uniform(k, shape, jnp.float32, -bound, bound)

    w1 = uinit(ks[0], (H, Cin, 5), Cin * 5)
    b1 = uinit(ks[1], (H,), Cin * 5)
    convs = []
    for i in range(layer_num - 1):
        convs.append((uinit(ks[2 + 2 * i], (H, H, 2), H * 2),
                      uinit(ks[3 + 2 * i], (H,), H * 2)))
    fc_in = H * multiples[layer_num - 1]
    wfc = uinit(ks[-3], (num_classes, fc_in), fc_in)
    bfc = uinit(ks[-2], (num_classes,), fc_in)
    params = (w1, b1, convs, wfc, bfc)

    # sanity: geometry-implied flatten size matches fc1's expected input
    T_final = (L - 5) // 3 + 1 - (layer_num - 1)
    assert H * (T_final // 3) == fc_in

    x = jax.random.normal(ks[-1], (B, Cin, L), jnp.float32)

    prepped = prepare_params(params, num_classes)   # one-time, not per call
    fwd = jax.jit(cnn_forward, static_argnames=("num_classes",))
    out = jax.block_until_ready(fwd(x, prepped, num_classes=num_classes))

    ref = ref_forward(x, params)
    assert out.shape == (B, num_classes)
    assert jnp.allclose(out, ref, atol=1e-4, rtol=1e-4), (out, ref)

    print("KERNEL_OK")
</pallas_src>

<mosaic_0001>
module attributes {stable_mosaic.version = 11 : i64} {
  func.func @kernel(%arg0: memref<32x20xf32, #tpu.memory_space<vmem>>, %arg1: memref<20x32xf32, #tpu.memory_space<vmem>>, %arg2: memref<1x32xf32, #tpu.memory_space<vmem>>, %arg3: memref<32x32xf32, #tpu.memory_space<vmem>>, %arg4: memref<32x32xf32, #tpu.memory_space<vmem>>, %arg5: memref<1x32xf32, #tpu.memory_space<vmem>>, %arg6: memref<5x32x128xf32, #tpu.memory_space<vmem>>, %arg7: memref<1x128xf32, #tpu.memory_space<vmem>>, %arg8: memref<2x128xf32, #tpu.memory_space<vmem>>) attributes {dimension_semantics = [], scalar_prefetch = 0 : i64, scratch_operands = 0 : i64, tpu.core_type = #tpu.core_type<tc>} {
    %c0 = arith.constant 0 : index
    %c0_0 = arith.constant 0 : index
    %0 = vector.load %arg0[%c0, %c0_0] : memref<32x20xf32, #tpu.memory_space<vmem>>, vector<32x20xf32>
    %c0_1 = arith.constant 0 : index
    %c0_2 = arith.constant 0 : index
    %1 = vector.load %arg1[%c0_1, %c0_2] : memref<20x32xf32, #tpu.memory_space<vmem>>, vector<20x32xf32>
    %cst = arith.constant dense<0.000000e+00> : vector<32x32xf32>
    %2 = tpu.matmul %0, %1, %cst {dimension_numbers = #tpu.dot_dimension_numbers<[1], [0], [0], [1], [0, 0, 1, 1], [], []>} : vector<32x20xf32>, vector<20x32xf32>, vector<32x32xf32> -> vector<32x32xf32>
    %c0_3 = arith.constant 0 : index
    %c0_4 = arith.constant 0 : index
    %3 = vector.load %arg2[%c0_3, %c0_4] : memref<1x32xf32, #tpu.memory_space<vmem>>, vector<1x32xf32>
    %4 = vector.broadcast %3 : vector<1x32xf32> to vector<32x32xf32>
    %5 = arith.addf %2, %4 : vector<32x32xf32>
    %cst_5 = arith.constant 0.000000e+00 : f32
    %6 = vector.broadcast %cst_5 : f32 to vector<32x32xf32>
    %7 = arith.maximumf %5, %6 : vector<32x32xf32>
    %8 = tpu.iota {dimensions = array<i32: 0>} : vector<32x32xi32>
    %9 = tpu.iota {dimensions = array<i32: 1>} : vector<32x32xi32>
    %c1_i32 = arith.constant 1 : i32
    %10 = vector.broadcast %c1_i32 : i32 to vector<32x32xi32>
    %11 = arith.addi %8, %10 : vector<32x32xi32>
    %12 = arith.cmpi eq, %9, %11 : vector<32x32xi32>
    %cst_6 = arith.constant 1.000000e+00 : f32
    %cst_7 = arith.constant 0.000000e+00 : f32
    %13 = vector.broadcast %cst_6 : f32 to vector<32x32xf32>
    %14 = vector.broadcast %cst_7 : f32 to vector<32x32xf32>
    %15 = arith.select %12, %13, %14 : vector<32x32xi1>, vector<32x32xf32>
    %c0_8 = arith.constant 0 : index
    %c0_9 = arith.constant 0 : index
    %16 = vector.load %arg3[%c0_8, %c0_9] : memref<32x32xf32, #tpu.memory_space<vmem>>, vector<32x32xf32>
    %c0_10 = arith.constant 0 : index
    %c0_11 = arith.constant 0 : index
    %17 = vector.load %arg4[%c0_10, %c0_11] : memref<32x32xf32, #tpu.memory_space<vmem>>, vector<32x32xf32>
    %c0_12 = arith.constant 0 : index
    %c0_13 = arith.constant 0 : index
    %18 = vector.load %arg5[%c0_12, %c0_13] : memref<1x32xf32, #tpu.memory_space<vmem>>, vector<1x32xf32>
    %cst_14 = arith.constant dense<0.000000e+00> : vector<32x32xf32>
    %19 = tpu.matmul %15, %7, %cst_14 {dimension_numbers = #tpu.dot_dimension_numbers<[1], [0], [0], [1], [0, 0, 1, 1], [], []>} : vector<32x32xf32>, vector<32x32xf32>, vector<32x32xf32> -> vector<32x32xf32>
    %cst_15 = arith.constant dense<0.000000e+00> : vector<32x32xf32>
    %20 = tpu.matmul %7, %16, %cst_15 {dimension_numbers = #tpu.dot_dimension_numbers<[1], [0], [0], [1], [0, 0, 1, 1], [], []>} : vector<32x32xf32>, vector<32x32xf32>, vector<32x32xf32> -> vector<32x32xf32>
    %cst_16 = arith.constant dense<0.000000e+00> : vector<32x32xf32>
    %21 = tpu.matmul %19, %17, %cst_16 {dimension_numbers = #tpu.dot_dimension_numbers<[1], [0], [0], [1], [0, 0, 1, 1], [], []>} : vector<32x32xf32>, vector<32x32xf32>, vector<32x32xf32> -> vector<32x32xf32>
    %22 = arith.addf %20, %21 : vector<32x32xf32>
    %23 = vector.broadcast %18 : vector<1x32xf32> to vector<32x32xf32>
    %24 = arith.addf %22, %23 : vector<32x32xf32>
    %cst_17 = arith.constant 0.000000e+00 : f32
    %25 = vector.broadcast %cst_17 : f32 to vector<32x32xf32>
    %26 = arith.maximumf %24, %25 : vector<32x32xf32>
    %cst_18 = arith.constant dense<0.000000e+00> : vector<32x32xf32>
    %27 = tpu.matmul %15, %26, %cst_18 {dimension_numbers = #tpu.dot_dimension_numbers<[1], [0], [0], [1], [0, 0, 1, 1], [], []>} : vector<32x32xf32>, vector<32x32xf32>, vector<32x32xf32> -> vector<32x32xf32>
    %cst_19 = arith.constant dense<0.000000e+00> : vector<32x32xf32>
    %28 = tpu.matmul %15, %27, %cst_19 {dimension_numbers = #tpu.dot_dimension_numbers<[1], [0], [0], [1], [0, 0, 1, 1], [], []>} : vector<32x32xf32>, vector<32x32xf32>, vector<32x32xf32> -> vector<32x32xf32>
    %29 = arith.maximumf %26, %27 : vector<32x32xf32>
    %30 = arith.maximumf %29, %28 : vector<32x32xf32>
    %31 = vector.shape_cast %30 : vector<32x32xf32> to vector<2x16x32xf32>
    %32 = vector.extract_strided_slice %31 {offsets = [0, 0, 0], sizes = [2, 1, 32], strides = [1, 1, 1]} : vector<2x16x32xf32> to vector<2x1x32xf32>
    %33 = vector.shape_cast %32 : vector<2x1x32xf32> to vector<2x32xf32>
    %c0_20 = arith.constant 0 : index
    %c0_21 = arith.constant 0 : index
    %c0_22 = arith.constant 0 : index
    %34 = vector.load %arg6[%c0_20, %c0_21, %c0_22] : memref<5x32x128xf32, #tpu.memory_space<vmem>>, vector<1x32x128xf32>
    %35 = vector.shape_cast %34 : vector<1x32x128xf32> to vector<32x128xf32>
    %cst_23 = arith.constant dense<0.000000e+00> : vector<2x128xf32>
    %36 = tpu.matmul %33, %35, %cst_23 {dimension_numbers = #tpu.dot_dimension_numbers<[1], [0], [0], [1], [0, 0, 1, 1], [], []>} : vector<2x32xf32>, vector<32x128xf32>, vector<2x128xf32> -> vector<2x128xf32>
    %37 = vector.extract_strided_slice %31 {offsets = [0, 3, 0], sizes = [2, 1, 32], strides = [1, 1, 1]} : vector<2x16x32xf32> to vector<2x1x32xf32>
    %38 = vector.shape_cast %37 : vector<2x1x32xf32> to vector<2x32xf32>
    %c1 = arith.constant 1 : index
    %c0_24 = arith.constant 0 : index
    %c0_25 = arith.constant 0 : index
    %39 = vector.load %arg6[%c1, %c0_24, %c0_25] : memref<5x32x128xf32, #tpu.memory_space<vmem>>, vector<1x32x128xf32>
    %40 = vector.shape_cast %39 : vector<1x32x128xf32> to vector<32x128xf32>
    %cst_26 = arith.constant dense<0.000000e+00> : vector<2x128xf32>
    %41 = tpu.matmul %38, %40, %cst_26 {dimension_numbers = #tpu.dot_dimension_numbers<[1], [0], [0], [1], [0, 0, 1, 1], [], []>} : vector<2x32xf32>, vector<32x128xf32>, vector<2x128xf32> -> vector<2x128xf32>
    %42 = arith.addf %36, %41 : vector<2x128xf32>
    %43 = vector.extract_strided_slice %31 {offsets = [0, 6, 0], sizes = [2, 1, 32], strides = [1, 1, 1]} : vector<2x16x32xf32> to vector<2x1x32xf32>
    %44 = vector.shape_cast %43 : vector<2x1x32xf32> to vector<2x32xf32>
    %c2 = arith.constant 2 : index
    %c0_27 = arith.constant 0 : index
    %c0_28 = arith.constant 0 : index
    %45 = vector.load %arg6[%c2, %c0_27, %c0_28] : memref<5x32x128xf32, #tpu.memory_space<vmem>>, vector<1x32x128xf32>
    %46 = vector.shape_cast %45 : vector<1x32x128xf32> to vector<32x128xf32>
    %cst_29 = arith.constant dense<0.000000e+00> : vector<2x128xf32>
    %47 = tpu.matmul %44, %46, %cst_29 {dimension_numbers = #tpu.dot_dimension_numbers<[1], [0], [0], [1], [0, 0, 1, 1], [], []>} : vector<2x32xf32>, vector<32x128xf32>, vector<2x128xf32> -> vector<2x128xf32>
    %48 = arith.addf %42, %47 : vector<2x128xf32>
    %49 = vector.extract_strided_slice %31 {offsets = [0, 9, 0], sizes = [2, 1, 32], strides = [1, 1, 1]} : vector<2x16x32xf32> to vector<2x1x32xf32>
    %50 = vector.shape_cast %49 : vector<2x1x32xf32> to vector<2x32xf32>
    %c3 = arith.constant 3 : index
    %c0_30 = arith.constant 0 : index
    %c0_31 = arith.constant 0 : index
    %51 = vector.load %arg6[%c3, %c0_30, %c0_31] : memref<5x32x128xf32, #tpu.memory_space<vmem>>, vector<1x32x128xf32>
    %52 = vector.shape_cast %51 : vector<1x32x128xf32> to vector<32x128xf32>
    %cst_32 = arith.constant dense<0.000000e+00> : vector<2x128xf32>
    %53 = tpu.matmul %50, %52, %cst_32 {dimension_numbers = #tpu.dot_dimension_numbers<[1], [0], [0], [1], [0, 0, 1, 1], [], []>} : vector<2x32xf32>, vector<32x128xf32>, vector<2x128xf32> -> vector<2x128xf32>
    %54 = arith.addf %48, %53 : vector<2x128xf32>
    %55 = vector.extract_strided_slice %31 {offsets = [0, 12, 0], sizes = [2, 1, 32], strides = [1, 1, 1]} : vector<2x16x32xf32> to vector<2x1x32xf32>
    %56 = vector.shape_cast %55 : vector<2x1x32xf32> to vector<2x32xf32>
    %c4 = arith.constant 4 : index
    %c0_33 = arith.constant 0 : index
    %c0_34 = arith.constant 0 : index
    %57 = vector.load %arg6[%c4, %c0_33, %c0_34] : memref<5x32x128xf32, #tpu.memory_space<vmem>>, vector<1x32x128xf32>
    %58 = vector.shape_cast %57 : vector<1x32x128xf32> to vector<32x128xf32>
    %cst_35 = arith.constant dense<0.000000e+00> : vector<2x128xf32>
    %59 = tpu.matmul %56, %58, %cst_35 {dimension_numbers = #tpu.dot_dimension_numbers<[1], [0], [0], [1], [0, 0, 1, 1], [], []>} : vector<2x32xf32>, vector<32x128xf32>, vector<2x128xf32> -> vector<2x128xf32>
    %60 = arith.addf %54, %59 : vector<2x128xf32>
    %c0_36 = arith.constant 0 : index
    %c0_37 = arith.constant 0 : index
    %61 = vector.load %arg7[%c0_36, %c0_37] : memref<1x128xf32, #tpu.memory_space<vmem>>, vector<1x128xf32>
    %62 = vector.broadcast %61 : vector<1x128xf32> to vector<2x128xf32>
    %63 = arith.addf %60, %62 : vector<2x128xf32>
    %c0_38 = arith.constant 0 : index
    %c0_39 = arith.constant 0 : index
    %64 = vector.load %arg8[%c0_38, %c0_39] : memref<2x128xf32, #tpu.memory_space<vmem>>, vector<2x128xf32>
    tpu.vector_store %arg8[%c0_38, %c0_39], %63 {strides = array<i32>} : memref<2x128xf32, #tpu.memory_space<vmem>>, vector<2x128xf32>,
    return
  }
}

</mosaic_0001>

<llo_original>
// kernel: cnn_forward.1
$region0: #{cnn_forward.1}
  #allocation0 [shape = 'u32[]', space=smem, size = 0x4, offset = 0x4, fixed_abs, tag = 'smem constant byte address 0x4 - core index']
  #allocation1 [shape = 'u32[144,128]{1,0:T(1,128)}', space=vmem, size = 0x12000, scoped, tag = 'internal scratch']
  %s0 = inlined_call_operand.vmem [shape: f32[32,20], index: 0, kind: input, shape index: {}]
  %s1 = inlined_call_operand.vmem [shape: f32[20,32], index: 1, kind: input, shape index: {}]
  %s2 = inlined_call_operand.vmem [shape: f32[1,32], index: 2, kind: input, shape index: {}]
  %s3 = inlined_call_operand.vmem [shape: f32[32,32], index: 3, kind: input, shape index: {}]
  %s4 = inlined_call_operand.vmem [shape: f32[32,32], index: 4, kind: input, shape index: {}]
  %s5 = inlined_call_operand.vmem [shape: f32[1,32], index: 5, kind: input, shape index: {}]
  %s6 = inlined_call_operand.vmem [shape: f32[5,32,128], index: 6, kind: input, shape index: {}]
  %s7 = inlined_call_operand.vmem [shape: f32[1,128], index: 7, kind: input, shape index: {}]
  %s8 = inlined_call_operand.hbm [shape: f32[2,128], index: 8, kind: output, shape index: {}]
  %s9 = sld [smem:[#allocation0]]
  $region42: #{cnn_forward.1} parent=0
    _
  %s11 = ssub.s32 1, %s9
  %s12 = scalar_select 0, %s11, %s9
  $region1: #{cnn_forward.1} parent=0
    #allocation2 [shape = 'u8[1024]{0}', space=vmem, size = 0x400, scoped, tag = 'output window, operand 0, single buffered']
    #allocation3 [shape = 's32[1]{0}', space=sflag, size = 0x4, scoped, tag = 'scoped memory for cnn_forward.1']
    %13 = vsyncpa [#allocation3], 0
    // Predicated region
    $region2: #{cnn_forward.1} parent=1 // pred_check
      _
    $region3: #{cnn_forward.1} parent=1 // pred_check_branch
      %15 = sbr.rel (0) target = $region5
    $region4: #{cnn_forward.1} parent=1 // pred_region
      _
    $region5: #{cnn_forward.1} parent=1 // pred_fallthru
      _
    // Predicated region
    $region6: #{cnn_forward.1} parent=1 // pred_check
      _
    $region7: #{cnn_forward.1} parent=1 // pred_check_branch
      %17 = sbr.rel (0) target = $region9
    $region8: #{cnn_forward.1} parent=1 // pred_region
      _
    $region9: #{cnn_forward.1} parent=1 // pred_fallthru
      _
    // Predicated region
    $region10: #{cnn_forward.1} parent=1 // pred_check
      _
    $region11: #{cnn_forward.1} parent=1 // pred_check_branch
      %19 = sbr.rel (0) target = $region13
    $region12: #{cnn_forward.1} parent=1 // pred_region
      _
    $region13: #{cnn_forward.1} parent=1 // pred_fallthru
      _
    // Predicated region
    $region14: #{cnn_forward.1} parent=1 // pred_check
      _
    $region15: #{cnn_forward.1} parent=1 // pred_check_branch
      %21 = sbr.rel (0) target = $region17
    $region16: #{cnn_forward.1} parent=1 // pred_region
      _
    $region17: #{cnn_forward.1} parent=1 // pred_fallthru
      _
    // Predicated region
    $region18: #{cnn_forward.1} parent=1 // pred_check
      _
    $region19: #{cnn_forward.1} parent=1 // pred_check_branch
      %23 = sbr.rel (0) target = $region21
    $region20: #{cnn_forward.1} parent=1 // pred_region
      _
    $region21: #{cnn_forward.1} parent=1 // pred_fallthru
      _
    // Predicated region
    $region22: #{cnn_forward.1} parent=1 // pred_check
      _
    $region23: #{cnn_forward.1} parent=1 // pred_check_branch
      %25 = sbr.rel (0) target = $region25
    $region24: #{cnn_forward.1} parent=1 // pred_region
      _
    $region25: #{cnn_forward.1} parent=1 // pred_fallthru
      _
    // Predicated region
    $region26: #{cnn_forward.1} parent=1 // pred_check
      _
    $region27: #{cnn_forward.1} parent=1 // pred_check_branch
      %27 = sbr.rel (0) target = $region29
    $region28: #{cnn_forward.1} parent=1 // pred_region
      _
    $region29: #{cnn_forward.1} parent=1 // pred_fallthru
      _
    // Predicated region
    $region30: #{cnn_forward.1} parent=1 // pred_check
      _
    $region31: #{cnn_forward.1} parent=1 // pred_check_branch
      %29 = sbr.rel (0) target = $region33
    $region32: #{cnn_forward.1} parent=1 // pred_region
      _
    $region33: #{cnn_forward.1} parent=1 // pred_fallthru
      _
    %v30 = vld [vmem:[%s0] sm:$0xff]
    %v31 = vld [vmem:[%s0 + $0x8] sm:$0xff]
    %v32 = vld [vmem:[%s0 + $0x10] sm:$0xff]
    %v33 = vld [vmem:[%s0 + $0x18] sm:$0xff]
    %v34 = vld [vmem:[%s1] sm:$0xff]
    %v35 = vld [vmem:[%s1 + $0x8] sm:$0xff]
    %v36 = vld [vmem:[%s1 + $0x10] sm:$0xf]
    %v37 = vld [vmem:[%s2] sm:$0x1]
    %v39 = vlaneseq
    %v40 = vshrl.u32 %v39, 7
    %v41 = vsub.s32 0, %v40
    %v42 = vrot.slane %v37, %v41
    %vm44 = vcmask 162816
    %v46 = vsel %vm44, %v30, 0
    %v49 = vsel %vm44, %v31, 0
    %v52 = vsel %vm44, %v32, 0
    %v55 = vsel %vm44, %v33, 0
    %vm57 = vcmask 1043456
    %v59 = vsel %vm57, %v36, 0
    %61 = vmatprep.subr.mxu0 0.0
    %62 = vmatpush1.msra.mxu0 %v34
    %63 = vmatprep.subr.mxu0 0.0
    %64 = vmatpush1.msra.mxu0 %v35
    %65 = vmatprep.subr.mxu0 0.0
    %66 = vmatpush1.msra.mxu0 %v59
    %67 = vmatprep.subr.mxu0 0.0
    %68 = vmatpush1.msra.mxu0 0.0
    %69 = vmatprep.subr.mxu0 0.0
    %70 = vmatpush1.msra.mxu0 0.0
    %71 = vmatprep.subr.mxu0 0.0
    %72 = vmatpush1.msra.mxu0 0.0
    %73 = vmatprep.subr.mxu0 0.0
    %74 = vmatpush1.msra.mxu0 0.0
    %75 = vmatprep.subr.mxu0 0.0
    %76 = vmatpush1.msra.mxu0 0.0
    %77 = vmatprep.subr.mxu0 0.0
    %78 = vmatpush1.msra.mxu0 0.0
    %79 = vmatprep.subr.mxu0 0.0
    %80 = vmatpush1.msra.mxu0 0.0
    %81 = vmatprep.subr.mxu0 0.0
    %82 = vmatpush1.msra.mxu0 0.0
    %83 = vmatprep.subr.mxu0 0.0
    %84 = vmatpush1.msra.mxu0 0.0
    %85 = vmatprep.subr.mxu0 0.0
    %86 = vmatpush1.msra.mxu0 0.0
    %87 = vmatprep.subr.mxu0 0.0
    %88 = vmatpush1.msra.mxu0 0.0
    %89 = vmatprep.subr.mxu0 0.0
    %90 = vmatpush1.msra.mxu0 0.0
    %91 = vmatprep.subr.mxu0 0.0
    %92 = vmatpush1.msra.mxu0 0.0
    %93 = vmatprep.subr.mxu0 0.0
    %94 = vmatpush1.msra.mxu0 0.0
    %95 = vmatprep.subr.mxu0 0.0
    %96 = vmatpush1.msra.mxu0 0.0
    %97 = vmatprep.subr.mxu0 0.0
    %98 = vmatpush1.msra.mxu0 0.0
    %99 = vmatprep.subr.mxu0 0.0
    %100 = vmatpush1.msra.mxu0 0.0
    %101 = vmatprep.subr.mxu0 0.0
    %102 = vmatpush1.msra.mxu0 0.0
    %103 = vmatprep.subr.mxu0 0.0
    %104 = vmatpush1.msra.mxu0 0.0
    %105 = vmatprep.subr.mxu0 0.0
    %106 = vmatpush1.msra.mxu0 0.0
    %107 = vmatprep.subr.mxu0 0.0
    %108 = vmatpush1.msra.mxu0 0.0
    %109 = vmatprep.subr.mxu0 0.0
    %110 = vmatpush1.msra.mxu0 0.0
    %111 = vmatprep.subr.mxu0 0.0
    %112 = vmatpush1.msra.mxu0 0.0
    %113 = vmatprep.subr.mxu0 0.0
    %114 = vmatpush1.msra.mxu0 0.0
    %115 = vmatprep.subr.mxu0 0.0
    %116 = vmatpush1.msra.mxu0 0.0
    %117 = vmatprep.subr.mxu0 0.0
    %118 = vmatpush1.msra.mxu0 0.0
    %119 = vmatprep.subr.mxu0 0.0
    %120 = vmatpush1.msra.mxu0 0.0
    %121 = vmatprep.subr.mxu0 0.0
    %122 = vmatpush1.msra.mxu0 0.0
    %123 = vmatprep.subr.mxu0 0.0
    %124 = vmatpush1.msra.mxu0 0.0
    %125 = vmatprep.mubr.f32.mxu0 0.0
    %126 = vmatmul.mubr.f32.gmra.mrb[0].mxu0 %v46
    %v127 = vpop.f32.mrb[0].mxu0
    %v128 = vadd.f32 %v42, %v127
    %v129 = vpop.f32.mrb[0].mxu0
    %130 = vmatprep.mubr.f32.mxu0 0.0
    %131 = vmatmul.mubr.f32.gmra.mrb[0].mxu0 %v49
    %v132 = vpop.f32.mrb[0].mxu0
    %v133 = vadd.f32 %v42, %v132
    %v134 = vpop.f32.mrb[0].mxu0
    %135 = vmatprep.mubr.f32.mxu0 0.0
    %136 = vmatmul.mubr.f32.gmra.mrb[0].mxu0 %v52
    %v137 = vpop.f32.mrb[0].mxu0
    %v138 = vadd.f32 %v42, %v137
    %v139 = vpop.f32.mrb[0].mxu0
    %140 = vmatprep.mubr.f32.mxu0 0.0
    %141 = vmatmul.mubr.f32.gmra.mrb[0].mxu0 %v55
    %v142 = vpop.f32.mrb[0].mxu0
    %v143 = vadd.f32 %v42, %v142
    %v144 = vpop.f32.mrb[0].mxu0
    %145 = vdwg.mxu0
    %v146 = vmax.f32 %v128, 0.0
    %v147 = vmax.f32 %v133, 0.0
    %v148 = vmax.f32 %v138, 0.0
    %v149 = vmax.f32 %v143, 0.0
    %v150 = vlaneseq
    %v151 = vshrl.u32 %v150, 7
    %v152 = vadd.s32 %v151, 8
    %v153 = vadd.s32 %v151, 16
    %v154 = vadd.s32 %v151, 24
    %v155 = vlaneseq
    %v156 = vand.u32 %v155, 127
    %v157 = vadd.s32 %v151, 1
    %v158 = vadd.s32 %v152, 1
    %v159 = vadd.s32 %v153, 1
    %v160 = vadd.s32 %v154, 1
    %vm161 = vcmp.eq.s32.totalorder %v156, %v157
    %vm162 = vcmp.eq.s32.totalorder %v156, %v158
    %vm163 = vcmp.eq.s32.totalorder %v156, %v159
    %vm164 = vcmp.eq.s32.totalorder %v156, %v160
    %v165 = vsel %vm161, 1.0, 0.0
    %v166 = vsel %vm162, 1.0, 0.0
    %v167 = vsel %vm163, 1.0, 0.0
    %v168 = vsel %vm164, 1.0, 0.0
    %v169 = vld [vmem:[%s3] sm:$0xff]
    %v170 = vld [vmem:[%s3 + $0x8] sm:$0xff]
    %v171 = vld [vmem:[%s3 + $0x10] sm:$0xff]
    %v172 = vld [vmem:[%s3 + $0x18] sm:$0xff]
    %v173 = vld [vmem:[%s4] sm:$0xff]
    %v174 = vld [vmem:[%s4 + $0x8] sm:$0xff]
    %v175 = vld [vmem:[%s4 + $0x10] sm:$0xff]
    %v176 = vld [vmem:[%s4 + $0x18] sm:$0xff]
    %v177 = vld [vmem:[%s5] sm:$0x1]
    %vm178 = vcmask 261120
    %v180 = vsel %vm178, %v165, 0
    %v183 = vsel %vm178, %v166, 0
    %v186 = vsel %vm178, %v167, 0
    %v189 = vsel %vm178, %v168, 0
    %191 = vmatprep.subr.mxu0 0.0
    %192 = vmatpush1.msra.mxu0 %v146
    %193 = vmatprep.subr.mxu0 0.0
    %194 = vmatpush1.msra.mxu0 %v147
    %195 = vmatprep.subr.mxu0 0.0
    %196 = vmatpush1.msra.mxu0 %v148
    %197 = vmatprep.subr.mxu0 0.0
    %198 = vmatpush1.msra.mxu0 %v149
    %199 = vmatprep.subr.mxu0 0.0
    %200 = vmatpush1.msra.mxu0 0.0
    %201 = vmatprep.subr.mxu0 0.0
    %202 = vmatpush1.msra.mxu0 0.0
    %203 = vmatprep.subr.mxu0 0.0
    %204 = vmatpush1.msra.mxu0 0.0
    %205 = vmatprep.subr.mxu0 0.0
    %206 = vmatpush1.msra.mxu0 0.0
    %207 = vmatprep.subr.mxu0 0.0
    %208 = vmatpush1.msra.mxu0 0.0
    %209 = vmatprep.subr.mxu0 0.0
    %210 = vmatpush1.msra.mxu0 0.0
    %211 = vmatprep.subr.mxu0 0.0
    %212 = vmatpush1.msra.mxu0 0.0
    %213 = vmatprep.subr.mxu0 0.0
    %214 = vmatpush1.msra.mxu0 0.0
    %215 = vmatprep.subr.mxu0 0.0
    %216 = vmatpush1.msra.mxu0 0.0
    %217 = vmatprep.subr.mxu0 0.0
    %218 = vmatpush1.msra.mxu0 0.0
    %219 = vmatprep.subr.mxu0 0.0
    %220 = vmatpush1.msra.mxu0 0.0
    %221 = vmatprep.subr.mxu0 0.0
    %222 = vmatpush1.msra.mxu0 0.0
    %223 = vmatprep.subr.mxu0 0.0
    %224 = vmatpush1.msra.mxu0 0.0
    %225 = vmatprep.subr.mxu0 0.0
    %226 = vmatpush1.msra.mxu0 0.0
    %227 = vmatprep.subr.mxu0 0.0
    %228 = vmatpush1.msra.mxu0 0.0
    %229 = vmatprep.subr.mxu0 0.0
    %230 = vmatpush1.msra.mxu0 0.0
    %231 = vmatprep.subr.mxu0 0.0
    %232 = vmatpush1.msra.mxu0 0.0
    %233 = vmatprep.subr.mxu0 0.0
    %234 = vmatpush1.msra.mxu0 0.0
    %235 = vmatprep.subr.mxu0 0.0
    %236 = vmatpush1.msra.mxu0 0.0
    %237 = vmatprep.subr.mxu0 0.0
    %238 = vmatpush1.msra.mxu0 0.0
    %239 = vmatprep.subr.mxu0 0.0
    %240 = vmatpush1.msra.mxu0 0.0
    %241 = vmatprep.subr.mxu0 0.0
    %242 = vmatpush1.msra.mxu0 0.0
    %243 = vmatprep.subr.mxu0 0.0
    %244 = vmatpush1.msra.mxu0 0.0
    %245 = vmatprep.subr.mxu0 0.0
    %246 = vmatpush1.msra.mxu0 0.0
    %247 = vmatprep.subr.mxu0 0.0
    %248 = vmatpush1.msra.mxu0 0.0
    %249 = vmatprep.subr.mxu0 0.0
    %250 = vmatpush1.msra.mxu0 0.0
    %251 = vmatprep.subr.mxu0 0.0
    %252 = vmatpush1.msra.mxu0 0.0
    %253 = vmatprep.subr.mxu0 0.0
    %254 = vmatpush1.msra.mxu0 0.0
    %255 = vmatprep.mubr.f32.mxu0 0.0
    %256 = vmatmul.mubr.f32.gmra.mrb[0].mxu0 %v180
    %v257 = vpop.f32.mrb[0].mxu0
    %v258 = vadd.f32 0.0, %v257
    %v259 = vpop.f32.mrb[0].mxu0
    %260 = vmatprep.mubr.f32.mxu0 0.0
    %261 = vmatmul.mubr.f32.gmra.mrb[0].mxu0 %v183
    %v262 = vpop.f32.mrb[0].mxu0
    %v263 = vadd.f32 0.0, %v262
    %v264 = vpop.f32.mrb[0].mxu0
    %265 = vmatprep.mubr.f32.mxu0 0.0
    %266 = vmatmul.mubr.f32.gmra.mrb[0].mxu0 %v186
    %v267 = vpop.f32.mrb[0].mxu0
    %v268 = vadd.f32 0.0, %v267
    %v269 = vpop.f32.mrb[0].mxu0
    %270 = vmatprep.mubr.f32.mxu0 0.0
    %271 = vmatmul.mubr.f32.gmra.mrb[0].mxu0 %v189
    %v272 = vpop.f32.mrb[0].mxu0
    %v273 = vadd.f32 0.0, %v272
    %v274 = vpop.f32.mrb[0].mxu0
    %275 = vdwg.mxu0
    %v277 = vsel %vm178, %v258, 0
    %v280 = vsel %vm178, %v263, 0
    %v283 = vsel %vm178, %v268, 0
    %v286 = vsel %vm178, %v273, 0
    %288 = vmatprep.subr.mxu0 0.0
    %289 = vmatpush1.msra.mxu0 %v173
    %290 = vmatprep.subr.mxu0 0.0
    %291 = vmatpush1.msra.mxu0 %v174
    %292 = vmatprep.subr.mxu0 0.0
    %293 = vmatpush1.msra.mxu0 %v175
    %294 = vmatprep.subr.mxu0 0.0
    %295 = vmatpush1.msra.mxu0 %v176
    %296 = vmatprep.subr.mxu0 0.0
    %297 = vmatpush1.msra.mxu0 0.0
    %298 = vmatprep.subr.mxu0 0.0
    %299 = vmatpush1.msra.mxu0 0.0
    %300 = vmatprep.subr.mxu0 0.0
    %301 = vmatpush1.msra.mxu0 0.0
    %302 = vmatprep.subr.mxu0 0.0
    %303 = vmatpush1.msra.mxu0 0.0
    %304 = vmatprep.subr.mxu0 0.0
    %305 = vmatpush1.msra.mxu0 0.0
    %306 = vmatprep.subr.mxu0 0.0
    %307 = vmatpush1.msra.mxu0 0.0
    %308 = vmatprep.subr.mxu0 0.0
    %309 = vmatpush1.msra.mxu0 0.0
    %310 = vmatprep.subr.mxu0 0.0
    %311 = vmatpush1.msra.mxu0 0.0
    %312 = vmatprep.subr.mxu0 0.0
    %313 = vmatpush1.msra.mxu0 0.0
    %314 = vmatprep.subr.mxu0 0.0
    %315 = vmatpush1.msra.mxu0 0.0
    %316 = vmatprep.subr.mxu0 0.0
    %317 = vmatpush1.msra.mxu0 0.0
    %318 = vmatprep.subr.mxu0 0.0
    %319 = vmatpush1.msra.mxu0 0.0
    %320 = vmatprep.subr.mxu0 0.0
    %321 = vmatpush1.msra.mxu0 0.0
    %322 = vmatprep.subr.mxu0 0.0
    %323 = vmatpush1.msra.mxu0 0.0
    %324 = vmatprep.subr.mxu0 0.0
    %325 = vmatpush1.msra.mxu0 0.0
    %326 = vmatprep.subr.mxu0 0.0
    %327 = vmatpush1.msra.mxu0 0.0
    %328 = vmatprep.subr.mxu0 0.0
    %329 = vmatpush1.msra.mxu0 0.0
    %330 = vmatprep.subr.mxu0 0.0
    %331 = vmatpush1.msra.mxu0 0.0
    %332 = vmatprep.subr.mxu0 0.0
    %333 = vmatpush1.msra.mxu0 0.0
    %334 = vmatprep.subr.mxu0 0.0
    %335 = vmatpush1.msra.mxu0 0.0
    %336 = vmatprep.subr.mxu0 0.0
    %337 = vmatpush1.msra.mxu0 0.0
    %338 = vmatprep.subr.mxu0 0.0
    %339 = vmatpush1.msra.mxu0 0.0
    %340 = vmatprep.subr.mxu0 0.0
    %341 = vmatpush1.msra.mxu0 0.0
    %342 = vmatprep.subr.mxu0 0.0
    %343 = vmatpush1.msra.mxu0 0.0
    %344 = vmatprep.subr.mxu0 0.0
    %345 = vmatpush1.msra.mxu0 0.0
    %346 = vmatprep.subr.mxu0 0.0
    %347 = vmatpush1.msra.mxu0 0.0
    %348 = vmatprep.subr.mxu0 0.0
    %349 = vmatpush1.msra.mxu0 0.0
    %350 = vmatprep.subr.mxu0 0.0
    %351 = vmatpush1.msra.mxu0 0.0
    %352 = vmatprep.mubr.f32.mxu0 0.0
    %353 = vmatmul.mubr.f32.gmra.mrb[0].mxu0 %v277
    %v354 = vpop.f32.mrb[0].mxu0
    %v355 = vadd.f32 0.0, %v354
    %v356 = vpop.f32.mrb[0].mxu0
    %357 = vmatprep.mubr.f32.mxu0 0.0
    %358 = vmatmul.mubr.f32.gmra.mrb[0].mxu0 %v280
    %v359 = vpop.f32.mrb[0].mxu0
    %v360 = vadd.f32 0.0, %v359
    %v361 = vpop.f32.mrb[0].mxu0
    %362 = vmatprep.mubr.f32.mxu0 0.0
    %363 = vmatmul.mubr.f32.gmra.mrb[0].mxu0 %v283
    %v364 = vpop.f32.mrb[0].mxu0
    %v365 = vadd.f32 0.0, %v364
    %v366 = vpop.f32.mrb[0].mxu0
    %367 = vmatprep.mubr.f32.mxu0 0.0
    %368 = vmatmul.mubr.f32.gmra.mrb[0].mxu0 %v286
    %v369 = vpop.f32.mrb[0].mxu0
    %v370 = vadd.f32 0.0, %v369
    %v371 = vpop.f32.mrb[0].mxu0
    %372 = vdwg.mxu0
    %v374 = vsel %vm178, %v146, 0
    %v377 = vsel %vm178, %v147, 0
    %v380 = vsel %vm178, %v148, 0
    %v383 = vsel %vm178, %v149, 0
    %385 = vmatprep.subr.mxu0 0.0
    %386 = vmatpush1.msra.mxu0 %v169
    %387 = vmatprep.subr.mxu0 0.0
    %388 = vmatpush1.msra.mxu0 %v170
    %389 = vmatprep.subr.mxu0 0.0
    %390 = vmatpush1.msra.mxu0 %v171
    %391 = vmatprep.subr.mxu0 0.0
    %392 = vmatpush1.msra.mxu0 %v172
    %393 = vmatprep.subr.mxu0 0.0
    %394 = vmatpush1.msra.mxu0 0.0
    %395 = vmatprep.subr.mxu0 0.0
    %396 = vmatpush1.msra.mxu0 0.0
    %397 = vmatprep.subr.mxu0 0.0
    %398 = vmatpush1.msra.mxu0 0.0
    %399 = vmatprep.subr.mxu0 0.0
    %400 = vmatpush1.msra.mxu0 0.0
    %401 = vmatprep.subr.mxu0 0.0
    %402 = vmatpush1.msra.mxu0 0.0
    %403 = vmatprep.subr.mxu0 0.0
    %404 = vmatpush1.msra.mxu0 0.0
    %405 = vmatprep.subr.mxu0 0.0
    %406 = vmatpush1.msra.mxu0 0.0
    %407 = vmatprep.subr.mxu0 0.0
    %408 = vmatpush1.msra.mxu0 0.0
    %409 = vmatprep.subr.mxu0 0.0
    %410 = vmatpush1.msra.mxu0 0.0
    %411 = vmatprep.subr.mxu0 0.0
    %412 = vmatpush1.msra.mxu0 0.0
    %413 = vmatprep.subr.mxu0 0.0
    %414 = vmatpush1.msra.mxu0 0.0
    %415 = vmatprep.subr.mxu0 0.0
    %416 = vmatpush1.msra.mxu0 0.0
    %417 = vmatprep.subr.mxu0 0.0
    %418 = vmatpush1.msra.mxu0 0.0
    %419 = vmatprep.subr.mxu0 0.0
    %420 = vmatpush1.msra.mxu0 0.0
    %421 = vmatprep.subr.mxu0 0.0
    %422 = vmatpush1.msra.mxu0 0.0
    %423 = vmatprep.subr.mxu0 0.0
    %424 = vmatpush1.msra.mxu0 0.0
    %425 = vmatprep.subr.mxu0 0.0
    %426 = vmatpush1.msra.mxu0 0.0
    %427 = vmatprep.subr.mxu0 0.0
    %428 = vmatpush1.msra.mxu0 0.0
    %429 = vmatprep.subr.mxu0 0.0
    %430 = vmatpush1.msra.mxu0 0.0
    %431 = vmatprep.subr.mxu0 0.0
    %432 = vmatpush1.msra.mxu0 0.0
    %433 = vmatprep.subr.mxu0 0.0
    %434 = vmatpush1.msra.mxu0 0.0
    %435 = vmatprep.subr.mxu0 0.0
    %436 = vmatpush1.msra.mxu0 0.0
    %437 = vmatprep.subr.mxu0 0.0
    %438 = vmatpush1.msra.mxu0 0.0
    %439 = vmatprep.subr.mxu0 0.0
    %440 = vmatpush1.msra.mxu0 0.0
    %441 = vmatprep.subr.mxu0 0.0
    %442 = vmatpush1.msra.mxu0 0.0
    %443 = vmatprep.subr.mxu0 0.0
    %444 = vmatpush1.msra.mxu0 0.0
    %445 = vmatprep.subr.mxu0 0.0
    %446 = vmatpush1.msra.mxu0 0.0
    %447 = vmatprep.subr.mxu0 0.0
    %448 = vmatpush1.msra.mxu0 0.0
    %449 = vmatprep.mubr.f32.mxu0 0.0
    %450 = vmatmul.mubr.f32.gmra.mrb[0].mxu0 %v374
    %v451 = vpop.f32.mrb[0].mxu0
    %v452 = vadd.f32 %v355, %v451
    %v453 = vpop.f32.mrb[0].mxu0
    %454 = vmatprep.mubr.f32.mxu0 0.0
    %455 = vmatmul.mubr.f32.gmra.mrb[0].mxu0 %v377
    %v456 = vpop.f32.mrb[0].mxu0
    %v457 = vadd.f32 %v360, %v456
    %v458 = vpop.f32.mrb[0].mxu0
    %459 = vmatprep.mubr.f32.mxu0 0.0
    %460 = vmatmul.mubr.f32.gmra.mrb[0].mxu0 %v380
    %v461 = vpop.f32.mrb[0].mxu0
    %v462 = vadd.f32 %v365, %v461
    %v463 = vpop.f32.mrb[0].mxu0
    %464 = vmatprep.mubr.f32.mxu0 0.0
    %465 = vmatmul.mubr.f32.gmra.mrb[0].mxu0 %v383
    %v466 = vpop.f32.mrb[0].mxu0
    %v467 = vadd.f32 %v370, %v466
    %v468 = vpop.f32.mrb[0].mxu0
    %469 = vdwg.mxu0
    %v471 = vlaneseq
    %v472 = vshrl.u32 %v471, 7
    %v473 = vsub.s32 0, %v472
    %v474 = vrot.slane %v177, %v473
    %v476 = vadd.f32 %v452, %v474
    %v477 = vadd.f32 %v457, %v474
    %v478 = vadd.f32 %v462, %v474
    %v479 = vadd.f32 %v467, %v474
    %v480 = vmax.f32 %v476, 0.0
    %v481 = vmax.f32 %v477, 0.0
    %v482 = vmax.f32 %v478, 0.0
    %v483 = vmax.f32 %v479, 0.0
    %484 = vmatprep.subr.mxu0 0.0
    %485 = vmatpush1.msra.mxu0 %v480
    %486 = vmatprep.subr.mxu0 0.0
    %487 = vmatpush1.msra.mxu0 %v481
    %488 = vmatprep.subr.mxu0 0.0
    %489 = vmatpush1.msra.mxu0 %v482
    %490 = vmatprep.subr.mxu0 0.0
    %491 = vmatpush1.msra.mxu0 %v483
    %492 = vmatprep.subr.mxu0 0.0
    %493 = vmatpush1.msra.mxu0 0.0
    %494 = vmatprep.subr.mxu0 0.0
    %495 = vmatpush1.msra.mxu0 0.0
    %496 = vmatprep.subr.mxu0 0.0
    %497 = vmatpush1.msra.mxu0 0.0
    %498 = vmatprep.subr.mxu0 0.0
    %499 = vmatpush1.msra.mxu0 0.0
    %500 = vmatprep.subr.mxu0 0.0
    %501 = vmatpush1.msra.mxu0 0.0
    %502 = vmatprep.subr.mxu0 0.0
    %503 = vmatpush1.msra.mxu0 0.0
    %504 = vmatprep.subr.mxu0 0.0
    %505 = vmatpush1.msra.mxu0 0.0
    %506 = vmatprep.subr.mxu0 0.0
    %507 = vmatpush1.msra.mxu0 0.0
    %508 = vmatprep.subr.mxu0 0.0
    %509 = vmatpush1.msra.mxu0 0.0
    %510 = vmatprep.subr.mxu0 0.0
    %511 = vmatpush1.msra.mxu0 0.0
    %512 = vmatprep.subr.mxu0 0.0
    %513 = vmatpush1.msra.mxu0 0.0
    %514 = vmatprep.subr.mxu0 0.0
    %515 = vmatpush1.msra.mxu0 0.0
    %516 = vmatprep.subr.mxu0 0.0
    %517 = vmatpush1.msra.mxu0 0.0
    %518 = vmatprep.subr.mxu0 0.0
    %519 = vmatpush1.msra.mxu0 0.0
    %520 = vmatprep.subr.mxu0 0.0
    %521 = vmatpush1.msra.mxu0 0.0
    %522 = vmatprep.subr.mxu0 0.0
    %523 = vmatpush1.msra.mxu0 0.0
    %524 = vmatprep.subr.mxu0 0.0
    %525 = vmatpush1.msra.mxu0 0.0
    %526 = vmatprep.subr.mxu0 0.0
    %527 = vmatpush1.msra.mxu0 0.0
    %528 = vmatprep.subr.mxu0 0.0
    %529 = vmatpush1.msra.mxu0 0.0
    %530 = vmatprep.subr.mxu0 0.0
    %531 = vmatpush1.msra.mxu0 0.0
    %532 = vmatprep.subr.mxu0 0.0
    %533 = vmatpush1.msra.mxu0 0.0
    %534 = vmatprep.subr.mxu0 0.0
    %535 = vmatpush1.msra.mxu0 0.0
    %536 = vmatprep.subr.mxu0 0.0
    %537 = vmatpush1.msra.mxu0 0.0
    %538 = vmatprep.subr.mxu0 0.0
    %539 = vmatpush1.msra.mxu0 0.0
    %540 = vmatprep.subr.mxu0 0.0
    %541 = vmatpush1.msra.mxu0 0.0
    %542 = vmatprep.subr.mxu0 0.0
    %543 = vmatpush1.msra.mxu0 0.0
    %544 = vmatprep.subr.mxu0 0.0
    %545 = vmatpush1.msra.mxu0 0.0
    %546 = vmatprep.subr.mxu0 0.0
    %547 = vmatpush1.msra.mxu0 0.0
    %548 = vmatprep.mubr.f32.mxu0 0.0
    %549 = vmatmul.mubr.f32.gmra.mrb[0].mxu0 %v180
    %v550 = vpop.f32.mrb[0].mxu0
    %v551 = vadd.f32 0.0, %v550
    %v552 = vpop.f32.mrb[0].mxu0
    %553 = vmatprep.mubr.f32.mxu0 0.0
    %554 = vmatmul.mubr.f32.gmra.mrb[0].mxu0 %v183
    %v555 = vpop.f32.mrb[0].mxu0
    %v556 = vadd.f32 0.0, %v555
    %v557 = vpop.f32.mrb[0].mxu0
    %558 = vmatprep.mubr.f32.mxu0 0.0
    %559 = vmatmul.mubr.f32.gmra.mrb[0].mxu0 %v186
    %v560 = vpop.f32.mrb[0].mxu0
    %v561 = vadd.f32 0.0, %v560
    %v562 = vpop.f32.mrb[0].mxu0
    %563 = vmatprep.mubr.f32.mxu0 0.0
    %564 = vmatmul.mubr.f32.gmra.mrb[0].mxu0 %v189
    %v565 = vpop.f32.mrb[0].mxu0
    %v566 = vadd.f32 0.0, %v565
    %v567 = vpop.f32.mrb[0].mxu0
    %568 = vdwg.mxu0
    %569 = vmatprep.subr.mxu0 0.0
    %570 = vmatpush1.msra.mxu0 %v551
    %571 = vmatprep.subr.mxu0 0.0
    %572 = vmatpush1.msra.mxu0 %v556
    %573 = vmatprep.subr.mxu0 0.0
    %574 = vmatpush1.msra.mxu0 %v561
    %575 = vmatprep.subr.mxu0 0.0
    %576 = vmatpush1.msra.mxu0 %v566
    %577 = vmatprep.subr.mxu0 0.0
    %578 = vmatpush1.msra.mxu0 0.0
    %579 = vmatprep.subr.mxu0 0.0
    %580 = vmatpush1.msra.mxu0 0.0
    %581 = vmatprep.subr.mxu0 0.0
    %582 = vmatpush1.msra.mxu0 0.0
    %583 = vmatprep.subr.mxu0 0.0
    %584 = vmatpush1.msra.mxu0 0.0
    %585 = vmatprep.subr.mxu0 0.0
    %586 = vmatpush1.msra.mxu0 0.0
    %587 = vmatprep.subr.mxu0 0.0
    %588 = vmatpush1.msra.mxu0 0.0
    %589 = vmatprep.subr.mxu0 0.0
    %590 = vmatpush1.msra.mxu0 0.0
    %591 = vmatprep.subr.mxu0 0.0
    %592 = vmatpush1.msra.mxu0 0.0
    %593 = vmatprep.subr.mxu0 0.0
    %594 = vmatpush1.msra.mxu0 0.0
    %595 = vmatprep.subr.mxu0 0.0
    %596 = vmatpush1.msra.mxu0 0.0
    %597 = vmatprep.subr.mxu0 0.0
    %598 = vmatpush1.msra.mxu0 0.0
    %599 = vmatprep.subr.mxu0 0.0
    %600 = vmatpush1.msra.mxu0 0.0
    %601 = vmatprep.subr.mxu0 0.0
    %602 = vmatpush1.msra.mxu0 0.0
    %603 = vmatprep.subr.mxu0 0.0
    %604 = vmatpush1.msra.mxu0 0.0
    %605 = vmatprep.subr.mxu0 0.0
    %606 = vmatpush1.msra.mxu0 0.0
    %607 = vmatprep.subr.mxu0 0.0
    %608 = vmatpush1.msra.mxu0 0.0
    %609 = vmatprep.subr.mxu0 0.0
    %610 = vmatpush1.msra.mxu0 0.0
    %611 = vmatprep.subr.mxu0 0.0
    %612 = vmatpush1.msra.mxu0 0.0
    %613 = vmatprep.subr.mxu0 0.0
    %614 = vmatpush1.msra.mxu0 0.0
    %615 = vmatprep.subr.mxu0 0.0
    %616 = vmatpush1.msra.mxu0 0.0
    %617 = vmatprep.subr.mxu0 0.0
    %618 = vmatpush1.msra.mxu0 0.0
    %619 = vmatprep.subr.mxu0 0.0
    %620 = vmatpush1.msra.mxu0 0.0
    %621 = vmatprep.subr.mxu0 0.0
    %622 = vmatpush1.msra.mxu0 0.0
    %623 = vmatprep.subr.mxu0 0.0
    %624 = vmatpush1.msra.mxu0 0.0
    %625 = vmatprep.subr.mxu0 0.0
    %626 = vmatpush1.msra.mxu0 0.0
    %627 = vmatprep.subr.mxu0 0.0
    %628 = vmatpush1.msra.mxu0 0.0
    %629 = vmatprep.subr.mxu0 0.0
    %630 = vmatpush1.msra.mxu0 0.0
    %631 = vmatprep.subr.mxu0 0.0
    %632 = vmatpush1.msra.mxu0 0.0
    %633 = vmatprep.mubr.f32.mxu0 0.0
    %634 = vmatmul.mubr.f32.gmra.mrb[0].mxu0 %v180
    %v635 = vpop.f32.mrb[0].mxu0
    %v636 = vadd.f32 0.0, %v635
    %v637 = vpop.f32.mrb[0].mxu0
    %638 = vmatprep.mubr.f32.mxu0 0.0
    %639 = vmatmul.mubr.f32.gmra.mrb[0].mxu0 %v183
    %v640 = vpop.f32.mrb[0].mxu0
    %v641 = vadd.f32 0.0, %v640
    %v642 = vpop.f32.mrb[0].mxu0
    %643 = vmatprep.mubr.f32.mxu0 0.0
    %644 = vmatmul.mubr.f32.gmra.mrb[0].mxu0 %v186
    %v645 = vpop.f32.mrb[0].mxu0
    %v646 = vadd.f32 0.0, %v645
    %v647 = vpop.f32.mrb[0].mxu0
    %648 = vmatprep.mubr.f32.mxu0 0.0
    %649 = vmatmul.mubr.f32.gmra.mrb[0].mxu0 %v189
    %v650 = vpop.f32.mrb[0].mxu0
    %v651 = vadd.f32 0.0, %v650
    %v652 = vpop.f32.mrb[0].mxu0
    %653 = vdwg.mxu0
    %v654 = vmax.f32 %v480, %v551
    %v655 = vmax.f32 %v481, %v556
    %v656 = vmax.f32 %v482, %v561
    %v657 = vmax.f32 %v483, %v566
    %v658 = vmax.f32 %v654, %v636
    %v659 = vmax.f32 %v655, %v641
    %v660 = vmax.f32 %v656, %v646
    %v661 = vmax.f32 %v657, %v651
    %v662 = vld [vmem:[%s6] sm:$0xff]
    %v663 = vld [vmem:[%s6 + $0x8] sm:$0xff]
    %v664 = vld [vmem:[%s6 + $0x10] sm:$0xff]
    %v665 = vld [vmem:[%s6 + $0x18] sm:$0xff]
    %s666 = scalar_lea.vmem %s6, 32
    %v667 = vld [vmem:[%s666] sm:$0xff]
    %v668 = vld [vmem:[%s666 + $0x8] sm:$0xff]
    %v669 = vld [vmem:[%s666 + $0x10] sm:$0xff]
    %v670 = vld [vmem:[%s666 + $0x18] sm:$0xff]
    %v673 = vrot.slane %v658, 3
    %v674 = vrot.slane %v660, 2
    %vm675 = vcmask 1041409
    %v676 = vsel %vm675, %v674, %v673
    %v677 = vsel %vm178, %v676, 0
    %679 = vmatprep.subr.mxu0 0.0
    %680 = vmatpush1.msra.mxu0 %v667
    %681 = vmatprep.subr.mxu0 0.0
    %682 = vmatpush1.msra.mxu0 %v668
    %683 = vmatprep.subr.mxu0 0.0
    %684 = vmatpush1.msra.mxu0 %v669
    %685 = vmatprep.subr.mxu0 0.0
    %686 = vmatpush1.msra.mxu0 %v670
    %687 = vmatprep.subr.mxu0 0.0
    %688 = vmatpush1.msra.mxu0 0.0
    %689 = vmatprep.subr.mxu0 0.0
    %690 = vmatpush1.msra.mxu0 0.0
    %691 = vmatprep.subr.mxu0 0.0
    %692 = vmatpush1.msra.mxu0 0.0
    %693 = vmatprep.subr.mxu0 0.0
    %694 = vmatpush1.msra.mxu0 0.0
    %695 = vmatprep.subr.mxu0 0.0
    %696 = vmatpush1.msra.mxu0 0.0
    %697 = vmatprep.subr.mxu0 0.0
    %698 = vmatpush1.msra.mxu0 0.0
    %699 = vmatprep.subr.mxu0 0.0
    %700 = vmatpush1.msra.mxu0 0.0
    %701 = vmatprep.subr.mxu0 0.0
    %702 = vmatpush1.msra.mxu0 0.0
    %703 = vmatprep.subr.mxu0 0.0
    %704 = vmatpush1.msra.mxu0 0.0
    %705 = vmatprep.subr.mxu0 0.0
    %706 = vmatpush1.msra.mxu0 0.0
    %707 = vmatprep.subr.mxu0 0.0
    %708 = vmatpush1.msra.mxu0 0.0
    %709 = vmatprep.subr.mxu0 0.0
    %710 = vmatpush1.msra.mxu0 0.0
    %711 = vmatprep.subr.mxu0 0.0
    %712 = vmatpush1.msra.mxu0 0.0
    %713 = vmatprep.subr.mxu0 0.0
    %714 = vmatpush1.msra.mxu0 0.0
    %715 = vmatprep.subr.mxu0 0.0
    %716 = vmatpush1.msra.mxu0 0.0
    %717 = vmatprep.subr.mxu0 0.0
    %718 = vmatpush1.msra.mxu0 0.0
    %719 = vmatprep.subr.mxu0 0.0
    %720 = vmatpush1.msra.mxu0 0.0
    %721 = vmatprep.subr.mxu0 0.0
    %722 = vmatpush1.msra.mxu0 0.0
    %723 = vmatprep.subr.mxu0 0.0
    %724 = vmatpush1.msra.mxu0 0.0
    %725 = vmatprep.subr.mxu0 0.0
    %726 = vmatpush1.msra.mxu0 0.0
    %727 = vmatprep.subr.mxu0 0.0
    %728 = vmatpush1.msra.mxu0 0.0
    %729 = vmatprep.subr.mxu0 0.0
    %730 = vmatpush1.msra.mxu0 0.0
    %731 = vmatprep.subr.mxu0 0.0
    %732 = vmatpush1.msra.mxu0 0.0
    %733 = vmatprep.subr.mxu0 0.0
    %734 = vmatpush1.msra.mxu0 0.0
    %735 = vmatprep.subr.mxu0 0.0
    %736 = vmatpush1.msra.mxu0 0.0
    %737 = vmatprep.subr.mxu0 0.0
    %738 = vmatpush1.msra.mxu0 0.0
    %739 = vmatprep.subr.mxu0 0.0
    %740 = vmatpush1.msra.mxu0 0.0
    %741 = vmatprep.subr.mxu0 0.0
    %742 = vmatpush1.msra.mxu0 0.0
    %743 = vmatprep.mubr.f32.mxu0 0.0
    %744 = vmatmul.mubr.f32.gmra.mrb[0].mxu0 %v677
    %v745 = vpop.f32.mrb[0].mxu0
    %v746 = vadd.f32 0.0, %v745
    %v747 = vpop.f32.mrb[0].mxu0
    %748 = vdwg.mxu0
    %v749 = vrot.slane %v660, 7
    %v750 = vsel %vm675, %v749, %v658
    %v751 = vsel %vm178, %v750, 0
    %753 = vmatprep.subr.mxu0 0.0
    %754 = vmatpush1.msra.mxu0 %v662
    %755 = vmatprep.subr.mxu0 0.0
    %756 = vmatpush1.msra.mxu0 %v663
    %757 = vmatprep.subr.mxu0 0.0
    %758 = vmatpush1.msra.mxu0 %v664
    %759 = vmatprep.subr.mxu0 0.0
    %760 = vmatpush1.msra.mxu0 %v665
    %761 = vmatprep.subr.mxu0 0.0
    %762 = vmatpush1.msra.mxu0 0.0
    %763 = vmatprep.subr.mxu0 0.0
    %764 = vmatpush1.msra.mxu0 0.0
    %765 = vmatprep.subr.mxu0 0.0
    %766 = vmatpush1.msra.mxu0 0.0
    %767 = vmatprep.subr.mxu0 0.0
    %768 = vmatpush1.msra.mxu0 0.0
    %769 = vmatprep.subr.mxu0 0.0
    %770 = vmatpush1.msra.mxu0 0.0
    %771 = vmatprep.subr.mxu0 0.0
    %772 = vmatpush1.msra.mxu0 0.0
    %773 = vmatprep.subr.mxu0 0.0
    %774 = vmatpush1.msra.mxu0 0.0
    %775 = vmatprep.subr.mxu0 0.0
    %776 = vmatpush1.msra.mxu0 0.0
    %777 = vmatprep.subr.mxu0 0.0
    %778 = vmatpush1.msra.mxu0 0.0
    %779 = vmatprep.subr.mxu0 0.0
    %780 = vmatpush1.msra.mxu0 0.0
    %781 = vmatprep.subr.mxu0 0.0
    %782 = vmatpush1.msra.mxu0 0.0
    %783 = vmatprep.subr.mxu0 0.0
    %784 = vmatpush1.msra.mxu0 0.0
    %785 = vmatprep.subr.mxu0 0.0
    %786 = vmatpush1.msra.mxu0 0.0
    %787 = vmatprep.subr.mxu0 0.0
    %788 = vmatpush1.msra.mxu0 0.0
    %789 = vmatprep.subr.mxu0 0.0
    %790 = vmatpush1.msra.mxu0 0.0
    %791 = vmatprep.subr.mxu0 0.0
    %792 = vmatpush1.msra.mxu0 0.0
    %793 = vmatprep.subr.mxu0 0.0
    %794 = vmatpush1.msra.mxu0 0.0
    %795 = vmatprep.subr.mxu0 0.0
    %796 = vmatpush1.msra.mxu0 0.0
    %797 = vmatprep.subr.mxu0 0.0
    %798 = vmatpush1.msra.mxu0 0.0
    %799 = vmatprep.subr.mxu0 0.0
    %800 = vmatpush1.msra.mxu0 0.0
    %801 = vmatprep.subr.mxu0 0.0
    %802 = vmatpush1.msra.mxu0 0.0
    %803 = vmatprep.subr.mxu0 0.0
    %804 = vmatpush1.msra.mxu0 0.0
    %805 = vmatprep.subr.mxu0 0.0
    %806 = vmatpush1.msra.mxu0 0.0
    %807 = vmatprep.subr.mxu0 0.0
    %808 = vmatpush1.msra.mxu0 0.0
    %809 = vmatprep.subr.mxu0 0.0
    %810 = vmatpush1.msra.mxu0 0.0
    %811 = vmatprep.subr.mxu0 0.0
    %812 = vmatpush1.msra.mxu0 0.0
    %813 = vmatprep.subr.mxu0 0.0
    %814 = vmatpush1.msra.mxu0 0.0
    %815 = vmatprep.subr.mxu0 0.0
    %816 = vmatpush1.msra.mxu0 0.0
    %817 = vmatprep.mubr.f32.mxu0 0.0
    %818 = vmatmul.mubr.f32.gmra.mrb[0].mxu0 %v751
    %v819 = vpop.f32.mrb[0].mxu0
    %v820 = vadd.f32 %v746, %v819
    %v821 = vpop.f32.mrb[0].mxu0
    %822 = vdwg.mxu0
    %s823 = scalar_lea.vmem %s6, 64
    %v824 = vld [vmem:[%s823] sm:$0xff]
    %v825 = vld [vmem:[%s823 + $0x8] sm:$0xff]
    %v826 = vld [vmem:[%s823 + $0x10] sm:$0xff]
    %v827 = vld [vmem:[%s823 + $0x18] sm:$0xff]
    %v828 = vrot.slane %v658, 6
    %v829 = vrot.slane %v660, 5
    %v830 = vsel %vm675, %v829, %v828
    %v831 = vsel %vm178, %v830, 0
    %833 = vmatprep.subr.mxu0 0.0
    %834 = vmatpush1.msra.mxu0 %v824
    %835 = vmatprep.subr.mxu0 0.0
    %836 = vmatpush1.msra.mxu0 %v825
    %837 = vmatprep.subr.mxu0 0.0
    %838 = vmatpush1.msra.mxu0 %v826
    %839 = vmatprep.subr.mxu0 0.0
    %840 = vmatpush1.msra.mxu0 %v827
    %841 = vmatprep.subr.mxu0 0.0
    %842 = vmatpush1.msra.mxu0 0.0
    %843 = vmatprep.subr.mxu0 0.0
    %844 = vmatpush1.msra.mxu0 0.0
    %845 = vmatprep.subr.mxu0 0.0
    %846 = vmatpush1.msra.mxu0 0.0
    %847 = vmatprep.subr.mxu0 0.0
    %848 = vmatpush1.msra.mxu0 0.0
    %849 = vmatprep.subr.mxu0 0.0
    %850 = vmatpush1.msra.mxu0 0.0
    %851 = vmatprep.subr.mxu0 0.0
    %852 = vmatpush1.msra.mxu0 0.0
    %853 = vmatprep.subr.mxu0 0.0
    %854 = vmatpush1.msra.mxu0 0.0
    %855 = vmatprep.subr.mxu0 0.0
    %856 = vmatpush1.msra.mxu0 0.0
    %857 = vmatprep.subr.mxu0 0.0
    %858 = vmatpush1.msra.mxu0 0.0
    %859 = vmatprep.subr.mxu0 0.0
    %860 = vmatpush1.msra.mxu0 0.0
    %861 = vmatprep.subr.mxu0 0.0
    %862 = vmatpush1.msra.mxu0 0.0
    %863 = vmatprep.subr.mxu0 0.0
    %864 = vmatpush1.msra.mxu0 0.0
    %865 = vmatprep.subr.mxu0 0.0
    %866 = vmatpush1.msra.mxu0 0.0
    %867 = vmatprep.subr.mxu0 0.0
    %868 = vmatpush1.msra.mxu0 0.0
    %869 = vmatprep.subr.mxu0 0.0
    %870 = vmatpush1.msra.mxu0 0.0
    %871 = vmatprep.subr.mxu0 0.0
    %872 = vmatpush1.msra.mxu0 0.0
    %873 = vmatprep.subr.mxu0 0.0
    %874 = vmatpush1.msra.mxu0 0.0
    %875 = vmatprep.subr.mxu0 0.0
    %876 = vmatpush1.msra.mxu0 0.0
    %877 = vmatprep.subr.mxu0 0.0
    %878 = vmatpush1.msra.mxu0 0.0
    %879 = vmatprep.subr.mxu0 0.0
    %880 = vmatpush1.msra.mxu0 0.0
    %881 = vmatprep.subr.mxu0 0.0
    %882 = vmatpush1.msra.mxu0 0.0
    %883 = vmatprep.subr.mxu0 0.0
    %884 = vmatpush1.msra.mxu0 0.0
    %885 = vmatprep.subr.mxu0 0.0
    %886 = vmatpush1.msra.mxu0 0.0
    %887 = vmatprep.subr.mxu0 0.0
    %888 = vmatpush1.msra.mxu0 0.0
    %889 = vmatprep.subr.mxu0 0.0
    %890 = vmatpush1.msra.mxu0 0.0
    %891 = vmatprep.subr.mxu0 0.0
    %892 = vmatpush1.msra.mxu0 0.0
    %893 = vmatprep.subr.mxu0 0.0
    %894 = vmatpush1.msra.mxu0 0.0
    %895 = vmatprep.subr.mxu0 0.0
    %896 = vmatpush1.msra.mxu0 0.0
    %897 = vmatprep.mubr.f32.mxu0 0.0
    %898 = vmatmul.mubr.f32.gmra.mrb[0].mxu0 %v831
    %v899 = vpop.f32.mrb[0].mxu0
    %v900 = vadd.f32 0.0, %v899
    %v901 = vpop.f32.mrb[0].mxu0
    %902 = vdwg.mxu0
    %v903 = vadd.f32 %v820, %v900
    %s904 = scalar_lea.vmem %s6, 96
    %v905 = vld [vmem:[%s904] sm:$0xff]
    %v906 = vld [vmem:[%s904 + $0x8] sm:$0xff]
    %v907 = vld [vmem:[%s904 + $0x10] sm:$0xff]
    %v908 = vld [vmem:[%s904 + $0x18] sm:$0xff]
    %v911 = vrot.slane %v659, 1
    %v912 = vsel %vm675, %v661, %v911
    %v913 = vsel %vm178, %v912, 0
    %915 = vmatprep.subr.mxu0 0.0
    %916 = vmatpush1.msra.mxu0 %v905
    %917 = vmatprep.subr.mxu0 0.0
    %918 = vmatpush1.msra.mxu0 %v906
    %919 = vmatprep.subr.mxu0 0.0
    %920 = vmatpush1.msra.mxu0 %v907
    %921 = vmatprep.subr.mxu0 0.0
    %922 = vmatpush1.msra.mxu0 %v908
    %923 = vmatprep.subr.mxu0 0.0
    %924 = vmatpush1.msra.mxu0 0.0
    %925 = vmatprep.subr.mxu0 0.0
    %926 = vmatpush1.msra.mxu0 0.0
    %927 = vmatprep.subr.mxu0 0.0
    %928 = vmatpush1.msra.mxu0 0.0
    %929 = vmatprep.subr.mxu0 0.0
    %930 = vmatpush1.msra.mxu0 0.0
    %931 = vmatprep.subr.mxu0 0.0
    %932 = vmatpush1.msra.mxu0 0.0
    %933 = vmatprep.subr.mxu0 0.0
    %934 = vmatpush1.msra.mxu0 0.0
    %935 = vmatprep.subr.mxu0 0.0
    %936 = vmatpush1.msra.mxu0 0.0
    %937 = vmatprep.subr.mxu0 0.0
    %938 = vmatpush1.msra.mxu0 0.0
    %939 = vmatprep.subr.mxu0 0.0
    %940 = vmatpush1.msra.mxu0 0.0
    %941 = vmatprep.subr.mxu0 0.0
    %942 = vmatpush1.msra.mxu0 0.0
    %943 = vmatprep.subr.mxu0 0.0
    %944 = vmatpush1.msra.mxu0 0.0
    %945 = vmatprep.subr.mxu0 0.0
    %946 = vmatpush1.msra.mxu0 0.0
    %947 = vmatprep.subr.mxu0 0.0
    %948 = vmatpush1.msra.mxu0 0.0
    %949 = vmatprep.subr.mxu0 0.0
    %950 = vmatpush1.msra.mxu0 0.0
    %951 = vmatprep.subr.mxu0 0.0
    %952 = vmatpush1.msra.mxu0 0.0
    %953 = vmatprep.subr.mxu0 0.0
    %954 = vmatpush1.msra.mxu0 0.0
    %955 = vmatprep.subr.mxu0 0.0
    %956 = vmatpush1.msra.mxu0 0.0
    %957 = vmatprep.subr.mxu0 0.0
    %958 = vmatpush1.msra.mxu0 0.0
    %959 = vmatprep.subr.mxu0 0.0
    %960 = vmatpush1.msra.mxu0 0.0
    %961 = vmatprep.subr.mxu0 0.0
    %962 = vmatpush1.msra.mxu0 0.0
    %963 = vmatprep.subr.mxu0 0.0
    %964 = vmatpush1.msra.mxu0 0.0
    %965 = vmatprep.subr.mxu0 0.0
    %966 = vmatpush1.msra.mxu0 0.0
    %967 = vmatprep.subr.mxu0 0.0
    %968 = vmatpush1.msra.mxu0 0.0
    %969 = vmatprep.subr.mxu0 0.0
    %970 = vmatpush1.msra.mxu0 0.0
    %971 = vmatprep.subr.mxu0 0.0
    %972 = vmatpush1.msra.mxu0 0.0
    %973 = vmatprep.subr.mxu0 0.0
    %974 = vmatpush1.msra.mxu0 0.0
    %975 = vmatprep.subr.mxu0 0.0
    %976 = vmatpush1.msra.mxu0 0.0
    %977 = vmatprep.subr.mxu0 0.0
    %978 = vmatpush1.msra.mxu0 0.0
    %979 = vmatprep.mubr.f32.mxu0 0.0
    %980 = vmatmul.mubr.f32.gmra.mrb[0].mxu0 %v913
    %v981 = vpop.f32.mrb[0].mxu0
    %v982 = vadd.f32 0.0, %v981
    %v983 = vpop.f32.mrb[0].mxu0
    %984 = vdwg.mxu0
    %v985 = vadd.f32 %v903, %v982
    %s986 = scalar_lea.vmem %s6, 128
    %v987 = vld [vmem:[%s986] sm:$0xff]
    %v988 = vld [vmem:[%s986 + $0x8] sm:$0xff]
    %v989 = vld [vmem:[%s986 + $0x10] sm:$0xff]
    %v990 = vld [vmem:[%s986 + $0x18] sm:$0xff]
    %v991 = vrot.slane %v659, 4
    %v992 = vrot.slane %v661, 3
    %v993 = vsel %vm675, %v992, %v991
    %v994 = vsel %vm178, %v993, 0
    %996 = vmatprep.subr.mxu0 0.0
    %997 = vmatpush1.msra.mxu0 %v987
    %998 = vmatprep.subr.mxu0 0.0
    %999 = vmatpush1.msra.mxu0 %v988
    %1000 = vmatprep.subr.mxu0 0.0
    %1001 = vmatpush1.msra.mxu0 %v989
    %1002 = vmatprep.subr.mxu0 0.0
    %1003 = vmatpush1.msra.mxu0 %v990
    %1004 = vmatprep.subr.mxu0 0.0
    %1005 = vmatpush1.msra.mxu0 0.0
    %1006 = vmatprep.subr.mxu0 0.0
    %1007 = vmatpush1.msra.mxu0 0.0
    %1008 = vmatprep.subr.mxu0 0.0
    %1009 = vmatpush1.msra.mxu0 0.0
    %1010 = vmatprep.subr.mxu0 0.0
    %1011 = vmatpush1.msra.mxu0 0.0
    %1012 = vmatprep.subr.mxu0 0.0
    %1013 = vmatpush1.msra.mxu0 0.0
    %1014 = vmatprep.subr.mxu0 0.0
    %1015 = vmatpush1.msra.mxu0 0.0
    %1016 = vmatprep.subr.mxu0 0.0
    %1017 = vmatpush1.msra.mxu0 0.0
    %1018 = vmatprep.subr.mxu0 0.0
    %1019 = vmatpush1.msra.mxu0 0.0
    %1020 = vmatprep.subr.mxu0 0.0
    %1021 = vmatpush1.msra.mxu0 0.0
    %1022 = vmatprep.subr.mxu0 0.0
    %1023 = vmatpush1.msra.mxu0 0.0
    %1024 = vmatprep.subr.mxu0 0.0
    %1025 = vmatpush1.msra.mxu0 0.0
    %1026 = vmatprep.subr.mxu0 0.0
    %1027 = vmatpush1.msra.mxu0 0.0
    %1028 = vmatprep.subr.mxu0 0.0
    %1029 = vmatpush1.msra.mxu0 0.0
    %1030 = vmatprep.subr.mxu0 0.0
    %1031 = vmatpush1.msra.mxu0 0.0
    %1032 = vmatprep.subr.mxu0 0.0
    %1033 = vmatpush1.msra.mxu0 0.0
    %1034 = vmatprep.subr.mxu0 0.0
    %1035 = vmatpush1.msra.mxu0 0.0
    %1036 = vmatprep.subr.mxu0 0.0
    %1037 = vmatpush1.msra.mxu0 0.0
    %1038 = vmatprep.subr.mxu0 0.0
    %1039 = vmatpush1.msra.mxu0 0.0
    %1040 = vmatprep.subr.mxu0 0.0
    %1041 = vmatpush1.msra.mxu0 0.0
    %1042 = vmatprep.subr.mxu0 0.0
    %1043 = vmatpush1.msra.mxu0 0.0
    %1044 = vmatprep.subr.mxu0 0.0
    %1045 = vmatpush1.msra.mxu0 0.0
    %1046 = vmatprep.subr.mxu0 0.0
    %1047 = vmatpush1.msra.mxu0 0.0
    %1048 = vmatprep.subr.mxu0 0.0
    %1049 = vmatpush1.msra.mxu0 0.0
    %1050 = vmatprep.subr.mxu0 0.0
    %1051 = vmatpush1.msra.mxu0 0.0
    %1052 = vmatprep.subr.mxu0 0.0
    %1053 = vmatpush1.msra.mxu0 0.0
    %1054 = vmatprep.subr.mxu0 0.0
    %1055 = vmatpush1.msra.mxu0 0.0
    %1056 = vmatprep.subr.mxu0 0.0
    %1057 = vmatpush1.msra.mxu0 0.0
    %1058 = vmatprep.subr.mxu0 0.0
    %1059 = vmatpush1.msra.mxu0 0.0
    %1060 = vmatprep.mubr.f32.mxu0 0.0
    %1061 = vmatmul.mubr.f32.gmra.mrb[0].mxu0 %v994
    %v1062 = vpop.f32.mrb[0].mxu0
    %v1063 = vadd.f32 0.0, %v1062
    %v1064 = vpop.f32.mrb[0].mxu0
    %1065 = vdwg.mxu0
    %v1066 = vadd.f32 %v985, %v1063
    %v1067 = vld [vmem:[%s7] sm:$0x1]
    %v1069 = vlaneseq
    %v1070 = vshrl.u32 %v1069, 7
    %v1071 = vsub.s32 0, %v1070
    %v1072 = vrot.slane %v1067, %v1071
    %v1074 = vadd.f32 %v1066, %v1072
    %1075 = vst [vmem:[#allocation2] sm:$0x3] %v1074
    // Predicated region
    $region34: #{cnn_forward.1} parent=1 // pred_check
      _
    $region35: #{cnn_forward.1} parent=1 // pred_check_branch
      %1077 = sbr.rel (0) target = $region37
    $region36: #{cnn_forward.1} parent=1 // pred_region
      %s1079 = ssub.s32 32, 32
      %1080 = vsyncadd [#allocation3], %s1079
      %s1082 = sshll.u32 [#allocation2], 4
      %s1083 = int_to_ptr.vmem [resolvable:$true] %s1082
      %1085 = dma.vmem_to_hbm [thread:$0]  %s1083, 32, %s8, [#allocation3]
    $region37: #{cnn_forward.1} parent=1 // pred_fallthru
      _
    // Predicated region
    $region38: #{cnn_forward.1} parent=1 // pred_check
      _
    $region39: #{cnn_forward.1} parent=1 // pred_check_branch
      %1087 = sbr.rel (0) target = $region41
    $region40: #{cnn_forward.1} parent=1 // pred_region
      %1088 = dma.done [#allocation3], 32
    $region41: #{cnn_forward.1} parent=1 // pred_fallthru
      _
    %1089 = vsyncpa [#allocation3], 1

</llo_original>
